<compile_context>
chip_gen: v7x
topology: tpu7x:2x2x1
jax: 0.10.0
libtpu: 0.0.40
codegen_flags: <defaults>
</compile_context>

<pallas_src>
import numpy as np
import jax
import jax.numpy as jnp
from jax.experimental import pallas as pl
from jax.experimental.pallas import tpu as pltpu

_LANE = 128


def _round_up(n, m):
    return ((n + m - 1) // m) * m


def bcnet_kernel(x_ref, w1_ref, b1_ref, w2_ref, b2_ref, w3_ref, b3_ref, o_ref):
    # Layer 1: (TB, S) @ (S, Hp) + (1, Hp) -> tanh
    h1 = jnp.tanh(
        jnp.dot(x_ref[...], w1_ref[...], preferred_element_type=jnp.float32)
        + b1_ref[...]
    )
    # Layer 2: (TB, Hp) @ (Hp, Hp) + (1, Hp) -> tanh
    h2 = jnp.tanh(
        jnp.dot(h1, w2_ref[...], preferred_element_type=jnp.float32)
        + b2_ref[...]
    )
    # Layer 3: (TB, Hp) @ (Hp, Ap) + (1, Ap) -> (pi/2) * tanh   (lane-dense store)
    h3 = jnp.tanh(
        jnp.dot(h2, w3_ref[...], preferred_element_type=jnp.float32)
        + b3_ref[...]
    )
    o_ref[...] = (np.pi / 2.0) * h3.astype(o_ref.dtype)


def bcnet_forward(x, w1, b1, w2, b2, w3, b3, *, block_batch=512):
    """x: (B, state_dim) f32. Returns (B, action_dim) f32."""
    B, S = x.shape
    H = w1.shape[1]
    A = w3.shape[1]

    Hp = _round_up(H, _LANE)
    Ap = _round_up(A, _LANE)

    # Zero-pad feature dims so every vreg lane / the output store is dense.
    # Exact: padded weight rows/cols and biases are zero, tanh(0) = 0.
    w1p = jnp.zeros((S, Hp), jnp.float32).at[:, :H].set(w1)
    b1p = jnp.zeros((1, Hp), jnp.float32).at[:, :H].set(b1)
    w2p = jnp.zeros((Hp, Hp), jnp.float32).at[:H, :H].set(w2)
    b2p = jnp.zeros((1, Hp), jnp.float32).at[:, :H].set(b2)
    w3p = jnp.zeros((Hp, Ap), jnp.float32).at[:H, :A].set(w3)
    b3p = jnp.zeros((1, Ap), jnp.float32).at[:, :A].set(b3)

    # Batch tiling: pick a sublane-aligned tile and pad the batch to a multiple of it.
    TB = min(block_batch, _round_up(B, 8))
    Bp = _round_up(B, TB)
    xp = x if Bp == B else jnp.zeros((Bp, S), x.dtype).at[:B].set(x)

    grid = (Bp // TB,)
    # Weights/biases: same block for every grid step -> stay VMEM-resident.
    resident = lambda shape: pl.BlockSpec(shape, lambda i: (0, 0))

    out = pl.pallas_call(
        bcnet_kernel,
        out_shape=jax.ShapeDtypeStruct((Bp, Ap), jnp.float32),
        grid=grid,
        in_specs=[
            pl.BlockSpec((TB, S), lambda i: (i, 0)),   # batch-tiled activations
            resident(w1p.shape), resident(b1p.shape),
            resident(w2p.shape), resident(b2p.shape),
            resident(w3p.shape), resident(b3p.shape),
        ],
        out_specs=pl.BlockSpec((TB, Ap), lambda i: (i, 0)),
        compiler_params=pltpu.CompilerParams(
            dimension_semantics=("parallel",)),       # 2-TC sharding on v7x
    )(xp, w1p, b1p, w2p, b2p, w3p, b3p)

    # Strip batch and lane padding outside the kernel.
    return out[:B, :A]


def init_params(key, state_dim, hidden_dim, action_dim):
    """Deterministic init mimicking nn.Linear default (uniform +/- 1/sqrt(fan_in))."""
    ks = jax.random.split(key, 6)

    def lin(kw, kb, fan_in, fan_out):
        bound = 1.0 / np.sqrt(fan_in)
        w = jax.random.uniform(kw, (fan_in, fan_out), jnp.float32, -bound, bound)
        b = jax.random.uniform(kb, (1, fan_out), jnp.float32, -bound, bound)
        return w, b

    w1, b1 = lin(ks[0], ks[1], state_dim, hidden_dim)
    w2, b2 = lin(ks[2], ks[3], hidden_dim, hidden_dim)
    w3, b3 = lin(ks[4], ks[5], hidden_dim, action_dim)
    return w1, b1, w2, b2, w3, b3


if __name__ == "__main__":
    # Shapes consistent with the module: SheepDogEnv obs vector -> state_dim,
    # 1-D-ish action space -> action_dim.  Batch of rollout states so the
    # batch-tiled grid (two tiles of 128) is actually exercised.
    batch = 256
    state_dim = 8
    hidden_dim = 32
    action_dim = 2

    key = jax.random.PRNGKey(0)
    kx, kp = jax.random.split(key)
    x = jax.random.normal(kx, (batch, state_dim), jnp.float32)
    params = init_params(kp, state_dim, hidden_dim, action_dim)

    out = bcnet_forward(x, *params, block_batch=128)
    out = jax.block_until_ready(out)
    assert out.shape == (batch, action_dim)

    # Pure-JAX reference check of the forward semantics.
    w1, b1, w2, b2, w3, b3 = params
    h = jnp.tanh(x @ w1 + b1)
    h = jnp.tanh(h @ w2 + b2)
    ref = (np.pi / 2.0) * jnp.tanh(h @ w3 + b3)
    np.testing.assert_allclose(np.asarray(out), np.asarray(ref), rtol=1e-5, atol=1e-5)

    print("KERNEL_OK")
</pallas_src>

<mosaic_0001>
module attributes {stable_mosaic.version = 11 : i64} {
  func.func @bcnet_kernel(%arg0: i32, %arg1: memref<128x8xf32, #tpu.memory_space<vmem>>, %arg2: memref<8x128xf32, #tpu.memory_space<vmem>>, %arg3: memref<1x128xf32, #tpu.memory_space<vmem>>, %arg4: memref<128x128xf32, #tpu.memory_space<vmem>>, %arg5: memref<1x128xf32, #tpu.memory_space<vmem>>, %arg6: memref<128x128xf32, #tpu.memory_space<vmem>>, %arg7: memref<1x128xf32, #tpu.memory_space<vmem>>, %arg8: memref<128x128xf32, #tpu.memory_space<vmem>>) attributes {dimension_semantics = [#tpu.dimension_semantics<parallel>], iteration_bounds = array<i64: 2>, scalar_prefetch = 0 : i64, scratch_operands = 0 : i64, tpu.core_type = #tpu.core_type<tc>, window_params = [{transform_indices = @transform_0, window_bounds = array<i64: 128, 8>}, {pipeline_mode = #tpu.pipeline_mode<synchronous>, transform_indices = @transform_1, window_bounds = array<i64: 8, 128>}, {pipeline_mode = #tpu.pipeline_mode<synchronous>, transform_indices = @transform_2, window_bounds = array<i64: 1, 128>}, {pipeline_mode = #tpu.pipeline_mode<synchronous>, transform_indices = @transform_3, window_bounds = array<i64: 128, 128>}, {pipeline_mode = #tpu.pipeline_mode<synchronous>, transform_indices = @transform_4, window_bounds = array<i64: 1, 128>}, {pipeline_mode = #tpu.pipeline_mode<synchronous>, transform_indices = @transform_5, window_bounds = array<i64: 128, 128>}, {pipeline_mode = #tpu.pipeline_mode<synchronous>, transform_indices = @transform_6, window_bounds = array<i64: 1, 128>}, {transform_indices = @transform_7, window_bounds = array<i64: 128, 128>}]} {
    %c0 = arith.constant 0 : index
    %c0_0 = arith.constant 0 : index
    %0 = vector.load %arg1[%c0, %c0_0] : memref<128x8xf32, #tpu.memory_space<vmem>>, vector<128x8xf32>
    %c0_1 = arith.constant 0 : index
    %c0_2 = arith.constant 0 : index
    %1 = vector.load %arg2[%c0_1, %c0_2] : memref<8x128xf32, #tpu.memory_space<vmem>>, vector<8x128xf32>
    %cst = arith.constant dense<0.000000e+00> : vector<128x128xf32>
    %2 = tpu.matmul %0, %1, %cst {dimension_numbers = #tpu.dot_dimension_numbers<[1], [0], [0], [1], [0, 0, 1, 1], [], []>} : vector<128x8xf32>, vector<8x128xf32>, vector<128x128xf32> -> vector<128x128xf32>
    %c0_3 = arith.constant 0 : index
    %c0_4 = arith.constant 0 : index
    %3 = vector.load %arg3[%c0_3, %c0_4] : memref<1x128xf32, #tpu.memory_space<vmem>>, vector<1x128xf32>
    %4 = vector.broadcast %3 : vector<1x128xf32> to vector<128x128xf32>
    %5 = arith.addf %2, %4 : vector<128x128xf32>
    %6 = math.tanh %5 : vector<128x128xf32>
    %c0_5 = arith.constant 0 : index
    %c0_6 = arith.constant 0 : index
    %7 = vector.load %arg4[%c0_5, %c0_6] : memref<128x128xf32, #tpu.memory_space<vmem>>, vector<128x128xf32>
    %cst_7 = arith.constant dense<0.000000e+00> : vector<128x128xf32>
    %8 = tpu.matmul %6, %7, %cst_7 {dimension_numbers = #tpu.dot_dimension_numbers<[1], [0], [0], [1], [0, 0, 1, 1], [], []>} : vector<128x128xf32>, vector<128x128xf32>, vector<128x128xf32> -> vector<128x128xf32>
    %c0_8 = arith.constant 0 : index
    %c0_9 = arith.constant 0 : index
    %9 = vector.load %arg5[%c0_8, %c0_9] : memref<1x128xf32, #tpu.memory_space<vmem>>, vector<1x128xf32>
    %10 = vector.broadcast %9 : vector<1x128xf32> to vector<128x128xf32>
    %11 = arith.addf %8, %10 : vector<128x128xf32>
    %12 = math.tanh %11 : vector<128x128xf32>
    %c0_10 = arith.constant 0 : index
    %c0_11 = arith.constant 0 : index
    %13 = vector.load %arg6[%c0_10, %c0_11] : memref<128x128xf32, #tpu.memory_space<vmem>>, vector<128x128xf32>
    %cst_12 = arith.constant dense<0.000000e+00> : vector<128x128xf32>
    %14 = tpu.matmul %12, %13, %cst_12 {dimension_numbers = #tpu.dot_dimension_numbers<[1], [0], [0], [1], [0, 0, 1, 1], [], []>} : vector<128x128xf32>, vector<128x128xf32>, vector<128x128xf32> -> vector<128x128xf32>
    %c0_13 = arith.constant 0 : index
    %c0_14 = arith.constant 0 : index
    %15 = vector.load %arg7[%c0_13, %c0_14] : memref<1x128xf32, #tpu.memory_space<vmem>>, vector<1x128xf32>
    %16 = vector.broadcast %15 : vector<1x128xf32> to vector<128x128xf32>
    %17 = arith.addf %14, %16 : vector<128x128xf32>
    %18 = math.tanh %17 : vector<128x128xf32>
    %cst_15 = arith.constant 1.57079637 : f32
    %19 = vector.broadcast %cst_15 : f32 to vector<128x128xf32>
    %20 = arith.mulf %19, %18 : vector<128x128xf32>
    %c0_16 = arith.constant 0 : index
    %c0_17 = arith.constant 0 : index
    %21 = vector.load %arg8[%c0_16, %c0_17] : memref<128x128xf32, #tpu.memory_space<vmem>>, vector<128x128xf32>
    tpu.vector_store %arg8[%c0_16, %c0_17], %20 {strides = array<i32>} : memref<128x128xf32, #tpu.memory_space<vmem>>, vector<128x128xf32>,
    return
  }
  func.func @transform_0(%arg0: i32) -> (i32, i32) {
    %c0_i32 = arith.constant 0 : i32
    %c0_i32_0 = arith.constant 0 : i32
    return %arg0, %c0_i32 : i32, i32
  }
  func.func @transform_1(%arg0: i32) -> (i32, i32) {
    %c0_i32 = arith.constant 0 : i32
    %c0_i32_0 = arith.constant 0 : i32
    %c0_i32_1 = arith.constant 0 : i32
    return %c0_i32, %c0_i32_0 : i32, i32
  }
  func.func @transform_2(%arg0: i32) -> (i32, i32) {
    %c0_i32 = arith.constant 0 : i32
    %c0_i32_0 = arith.constant 0 : i32
    %c0_i32_1 = arith.constant 0 : i32
    return %c0_i32, %c0_i32_0 : i32, i32
  }
  func.func @transform_3(%arg0: i32) -> (i32, i32) {
    %c0_i32 = arith.constant 0 : i32
    %c0_i32_0 = arith.constant 0 : i32
    %c0_i32_1 = arith.constant 0 : i32
    return %c0_i32, %c0_i32_0 : i32, i32
  }
  func.func @transform_4(%arg0: i32) -> (i32, i32) {
    %c0_i32 = arith.constant 0 : i32
    %c0_i32_0 = arith.constant 0 : i32
    %c0_i32_1 = arith.constant 0 : i32
    return %c0_i32, %c0_i32_0 : i32, i32
  }
  func.func @transform_5(%arg0: i32) -> (i32, i32) {
    %c0_i32 = arith.constant 0 : i32
    %c0_i32_0 = arith.constant 0 : i32
    %c0_i32_1 = arith.constant 0 : i32
    return %c0_i32, %c0_i32_0 : i32, i32
  }
  func.func @transform_6(%arg0: i32) -> (i32, i32) {
    %c0_i32 = arith.constant 0 : i32
    %c0_i32_0 = arith.constant 0 : i32
    %c0_i32_1 = arith.constant 0 : i32
    return %c0_i32, %c0_i32_0 : i32, i32
  }
  func.func @transform_7(%arg0: i32) -> (i32, i32) {
    %c0_i32 = arith.constant 0 : i32
    %c0_i32_0 = arith.constant 0 : i32
    return %arg0, %c0_i32 : i32, i32
  }
}

</mosaic_0001>

<llo_original>
// kernel: tpu_custom_call.1
$region0: #{tpu_custom_call.1}
  #allocation0 [shape = 'u32[]', space=smem, size = 0x4, offset = 0x4, fixed_abs, tag = 'smem constant byte address 0x4 - core index']
  #allocation1 [shape = 'u32[144,128]{1,0:T(1,128)}', space=vmem, size = 0x12000, scoped, tag = 'internal scratch']
  %s0 = inlined_call_operand.vmem [shape: f32[256,8], index: 0, kind: input, shape index: {}]
  %s1 = inlined_call_operand.vmem [shape: f32[8,128], index: 1, kind: input, shape index: {}]
  %s2 = inlined_call_operand.vmem [shape: f32[1,128], index: 2, kind: input, shape index: {}]
  %s3 = inlined_call_operand.vmem [shape: f32[128,128], index: 3, kind: input, shape index: {}]
  %s4 = inlined_call_operand.vmem [shape: f32[1,128], index: 4, kind: input, shape index: {}]
  %s5 = inlined_call_operand.vmem [shape: f32[128,128], index: 5, kind: input, shape index: {}]
  %s6 = inlined_call_operand.vmem [shape: f32[1,128], index: 6, kind: input, shape index: {}]
  %s7 = inlined_call_operand.hbm [shape: f32[256,128], index: 7, kind: output, shape index: {}]
  %s8 = sld [smem:[#allocation0]]
  $region61: #{tpu_custom_call.1} parent=0
    _
  %s10 = ssub.s32 1, %s8
  %s11 = scalar_select 0, %s10, %s8
  $region1: #{tpu_custom_call.1} parent=0
    #allocation2 [shape = 'u8[131072]{0}', space=vmem, size = 0x20000, scoped, tag = 'output window, operand 0']
    #allocation3 [shape = 's32[2]{0}', space=sflag, size = 0x8, scoped, tag = 'scoped memory for tpu_custom_call.1']
    %12 = vsyncpa [#allocation3], 0
    %s13 = scalar_lea.sflag [#allocation3], 1
    %14 = vsyncpa %s13, 0
    loop: start=0, step=1, limit=4
    $region2: #{tpu_custom_call.1} parent=1 // loop_pre_header
      _
    $region3: #{tpu_custom_call.1} parent=1 // loop_header
      %s16 = sphi 0, %s20
      %p17 = scmp.ge.s32.totalorder %s16, 4
      %s26 = sphi 0, %s28
      %s29 = sphi 0, %s26
      %s30 = sphi 0, %s29
      %s46 = sphi 0, %s30
      %s50 = sphi 0, %s50
      %s52 = sphi 0, %s50
      %s53 = sphi 0, %s52
      %s67 = sphi 0, %s53
      %s71 = sphi 0, %s71
      %s73 = sphi 0, %s71
      %s74 = sphi 0, %s73
      %s88 = sphi 0, %s74
      %s92 = sphi 0, %s92
      %s94 = sphi 0, %s92
      %s95 = sphi 0, %s94
      %s109 = sphi 0, %s95
      %s113 = sphi 0, %s113
      %s115 = sphi 0, %s113
      %s116 = sphi 0, %s115
      %s130 = sphi 0, %s116
      %s134 = sphi 0, %s134
      %s136 = sphi 0, %s134
      %s137 = sphi 0, %s136
      %s151 = sphi 0, %s137
      %s155 = sphi 0, %s155
      %s157 = sphi 0, %s155
      %s158 = sphi 0, %s157
      %s172 = sphi 0, %s158
      %s178 = sphi 0, %s180
      %s181 = sphi 0, %s178
      %s182 = sphi 0, %s181
      %s198 = sphi 0, %s182
    $region4: #{tpu_custom_call.1} parent=1 // loop_header_branch
      %19 = sbr.rel (%p17) target = $region8
    $region5: #{tpu_custom_call.1} parent=1 // loop_body
      %s21 = ssub.s32 %s16, 1
      %s22 = ssub.s32 %s16, 2
      %s23 = sadd.s32 %s16, 1
      %s24 = ssub.s32 %s16, %s23
      %p25 = scmp.eq.s32.totalorder %s24, 0
      %s27 = sadd.s32 %s26, 1
      %s28 = scalar_select %p25, %s26, %s27
      %p31 = pneg %p25
      %p32 = scmp.eq.s32.totalorder %s16, 1
      %p33 = por %p31, %p32
      %p34 = scmp.ne.s32.totalorder %s26, %s29
      %p35 = scmp.eq.s32.totalorder %s16, 0
      %p36 = por %p34, %p35
      %p37 = scmp.ne.s32.totalorder %s26, %s29
      %p38 = scmp.eq.s32.totalorder %s21, 1
      %p39 = por %p37, %p38
      %p40 = scmp.ne.s32.totalorder %s29, %s30
      %p41 = scmp.eq.s32.totalorder %s21, 0
      %p42 = por %p40, %p41
      %p43 = scmp.ne.s32.totalorder %s29, %s30
      %p44 = scmp.eq.s32.totalorder %s22, 1
      %p45 = por %p43, %p44
      %p47 = scmp.ne.s32.totalorder %s30, %s46
      %p48 = scmp.eq.s32.totalorder %s22, 0
      %p49 = por %p47, %p48
      %s51 = sadd.s32 %s50, 1
      %p54 = scmp.eq.s32.totalorder %s16, 1
      %p55 = scmp.ne.s32.totalorder %s50, %s52
      %p56 = scmp.eq.s32.totalorder %s16, 0
      %p57 = por %p55, %p56
      %p58 = scmp.ne.s32.totalorder %s50, %s52
      %p59 = scmp.eq.s32.totalorder %s21, 1
      %p60 = por %p58, %p59
      %p61 = scmp.ne.s32.totalorder %s52, %s53
      %p62 = scmp.eq.s32.totalorder %s21, 0
      %p63 = por %p61, %p62
      %p64 = scmp.ne.s32.totalorder %s52, %s53
      %p65 = scmp.eq.s32.totalorder %s22, 1
      %p66 = por %p64, %p65
      %p68 = scmp.ne.s32.totalorder %s53, %s67
      %p69 = scmp.eq.s32.totalorder %s22, 0
      %p70 = por %p68, %p69
      %s72 = sadd.s32 %s71, 1
      %p75 = scmp.eq.s32.totalorder %s16, 1
      %p76 = scmp.ne.s32.totalorder %s71, %s73
      %p77 = scmp.eq.s32.totalorder %s16, 0
      %p78 = por %p76, %p77
      %p79 = scmp.ne.s32.totalorder %s71, %s73
      %p80 = scmp.eq.s32.totalorder %s21, 1
      %p81 = por %p79, %p80
      %p82 = scmp.ne.s32.totalorder %s73, %s74
      %p83 = scmp.eq.s32.totalorder %s21, 0
      %p84 = por %p82, %p83
      %p85 = scmp.ne.s32.totalorder %s73, %s74
      %p86 = scmp.eq.s32.totalorder %s22, 1
      %p87 = por %p85, %p86
      %p89 = scmp.ne.s32.totalorder %s74, %s88
      %p90 = scmp.eq.s32.totalorder %s22, 0
      %p91 = por %p89, %p90
      %s93 = sadd.s32 %s92, 1
      %p96 = scmp.eq.s32.totalorder %s16, 1
      %p97 = scmp.ne.s32.totalorder %s92, %s94
      %p98 = scmp.eq.s32.totalorder %s16, 0
      %p99 = por %p97, %p98
      %p100 = scmp.ne.s32.totalorder %s92, %s94
      %p101 = scmp.eq.s32.totalorder %s21, 1
      %p102 = por %p100, %p101
      %p103 = scmp.ne.s32.totalorder %s94, %s95
      %p104 = scmp.eq.s32.totalorder %s21, 0
      %p105 = por %p103, %p104
      %p106 = scmp.ne.s32.totalorder %s94, %s95
      %p107 = scmp.eq.s32.totalorder %s22, 1
      %p108 = por %p106, %p107
      %p110 = scmp.ne.s32.totalorder %s95, %s109
      %p111 = scmp.eq.s32.totalorder %s22, 0
      %p112 = por %p110, %p111
      %s114 = sadd.s32 %s113, 1
      %p117 = scmp.eq.s32.totalorder %s16, 1
      %p118 = scmp.ne.s32.totalorder %s113, %s115
      %p119 = scmp.eq.s32.totalorder %s16, 0
      %p120 = por %p118, %p119
      %p121 = scmp.ne.s32.totalorder %s113, %s115
      %p122 = scmp.eq.s32.totalorder %s21, 1
      %p123 = por %p121, %p122
      %p124 = scmp.ne.s32.totalorder %s115, %s116
      %p125 = scmp.eq.s32.totalorder %s21, 0
      %p126 = por %p124, %p125
      %p127 = scmp.ne.s32.totalorder %s115, %s116
      %p128 = scmp.eq.s32.totalorder %s22, 1
      %p129 = por %p127, %p128
      %p131 = scmp.ne.s32.totalorder %s116, %s130
      %p132 = scmp.eq.s32.totalorder %s22, 0
      %p133 = por %p131, %p132
      %s135 = sadd.s32 %s134, 1
      %p138 = scmp.eq.s32.totalorder %s16, 1
      %p139 = scmp.ne.s32.totalorder %s134, %s136
      %p140 = scmp.eq.s32.totalorder %s16, 0
      %p141 = por %p139, %p140
      %p142 = scmp.ne.s32.totalorder %s134, %s136
      %p143 = scmp.eq.s32.totalorder %s21, 1
      %p144 = por %p142, %p143
      %p145 = scmp.ne.s32.totalorder %s136, %s137
      %p146 = scmp.eq.s32.totalorder %s21, 0
      %p147 = por %p145, %p146
      %p148 = scmp.ne.s32.totalorder %s136, %s137
      %p149 = scmp.eq.s32.totalorder %s22, 1
      %p150 = por %p148, %p149
      %p152 = scmp.ne.s32.totalorder %s137, %s151
      %p153 = scmp.eq.s32.totalorder %s22, 0
      %p154 = por %p152, %p153
      %s156 = sadd.s32 %s155, 1
      %p159 = scmp.eq.s32.totalorder %s16, 1
      %p160 = scmp.ne.s32.totalorder %s155, %s157
      %p161 = scmp.eq.s32.totalorder %s16, 0
      %p162 = por %p160, %p161
      %p163 = scmp.ne.s32.totalorder %s155, %s157
      %p164 = scmp.eq.s32.totalorder %s21, 1
      %p165 = por %p163, %p164
      %p166 = scmp.ne.s32.totalorder %s157, %s158
      %p167 = scmp.eq.s32.totalorder %s21, 0
      %p168 = por %p166, %p167
      %p169 = scmp.ne.s32.totalorder %s157, %s158
      %p170 = scmp.eq.s32.totalorder %s22, 1
      %p171 = por %p169, %p170
      %p173 = scmp.ne.s32.totalorder %s158, %s172
      %p174 = scmp.eq.s32.totalorder %s22, 0
      %p175 = por %p173, %p174
      %s176 = ssub.s32 %s16, %s23
      %p177 = scmp.eq.s32.totalorder %s176, 0
      %s179 = sadd.s32 %s178, 1
      %s180 = scalar_select %p177, %s178, %s179
      %p183 = pneg %p177
      %p184 = scmp.eq.s32.totalorder %s16, 1
      %p185 = por %p183, %p184
      %p186 = scmp.ne.s32.totalorder %s178, %s181
      %p187 = scmp.eq.s32.totalorder %s16, 0
      %p188 = por %p186, %p187
      %p189 = scmp.ne.s32.totalorder %s178, %s181
      %p190 = scmp.eq.s32.totalorder %s21, 1
      %p191 = por %p189, %p190
      %p192 = scmp.ne.s32.totalorder %s181, %s182
      %p193 = scmp.eq.s32.totalorder %s21, 0
      %p194 = por %p192, %p193
      %p195 = scmp.ne.s32.totalorder %s181, %s182
      %p196 = scmp.eq.s32.totalorder %s22, 1
      %p197 = por %p195, %p196
      %p199 = scmp.ne.s32.totalorder %s182, %s198
      %p200 = scmp.eq.s32.totalorder %s22, 0
      %p201 = por %p199, %p200
      %p202 = scmp.le.s32.totalorder 1, %s16
      %p203 = scmp.lt.s32.totalorder %s16, 3
      %p204 = pnand %p202, %p203
      %p205 = pneg %p204
      // Predicated region
      $region9: #{tpu_custom_call.1} parent=5 // pred_check
        _
      $region10: #{tpu_custom_call.1} parent=5 // pred_check_branch
        %207 = sbr.rel (%p204) target = $region12
      $region11: #{tpu_custom_call.1} parent=5 // pred_region
        %s208 = ssub.s32 %s16, 1
        // Predicated region
        $region13: #{tpu_custom_call.1} parent=11 // pred_check
          %p209 = pneg %p63
        $region14: #{tpu_custom_call.1} parent=11 // pred_check_branch
          %211 = sbr.rel (%p209) target = $region16
        $region15: #{tpu_custom_call.1} parent=11 // pred_region
          _
        $region16: #{tpu_custom_call.1} parent=11 // pred_fallthru
          _
        // Predicated region
        $region17: #{tpu_custom_call.1} parent=11 // pred_check
          %p212 = pneg %p84
        $region18: #{tpu_custom_call.1} parent=11 // pred_check_branch
          %214 = sbr.rel (%p212) target = $region20
        $region19: #{tpu_custom_call.1} parent=11 // pred_region
          _
        $region20: #{tpu_custom_call.1} parent=11 // pred_fallthru
          _
        // Predicated region
        $region21: #{tpu_custom_call.1} parent=11 // pred_check
          %p215 = pneg %p105
        $region22: #{tpu_custom_call.1} parent=11 // pred_check_branch
          %217 = sbr.rel (%p215) target = $region24
        $region23: #{tpu_custom_call.1} parent=11 // pred_region
          _
        $region24: #{tpu_custom_call.1} parent=11 // pred_fallthru
          _
        // Predicated region
        $region25: #{tpu_custom_call.1} parent=11 // pred_check
          %p218 = pneg %p126
        $region26: #{tpu_custom_call.1} parent=11 // pred_check_branch
          %220 = sbr.rel (%p218) target = $region28
        $region27: #{tpu_custom_call.1} parent=11 // pred_region
          _
        $region28: #{tpu_custom_call.1} parent=11 // pred_fallthru
          _
        // Predicated region
        $region29: #{tpu_custom_call.1} parent=11 // pred_check
          %p221 = pneg %p147
        $region30: #{tpu_custom_call.1} parent=11 // pred_check_branch
          %223 = sbr.rel (%p221) target = $region32
        $region31: #{tpu_custom_call.1} parent=11 // pred_region
          _
        $region32: #{tpu_custom_call.1} parent=11 // pred_fallthru
          _
        // Predicated region
        $region33: #{tpu_custom_call.1} parent=11 // pred_check
          %p224 = pneg %p168
        $region34: #{tpu_custom_call.1} parent=11 // pred_check_branch
          %226 = sbr.rel (%p224) target = $region36
        $region35: #{tpu_custom_call.1} parent=11 // pred_region
          _
        $region36: #{tpu_custom_call.1} parent=11 // pred_fallthru
          _
      $region12: #{tpu_custom_call.1} parent=5 // pred_fallthru
        _
      %p227 = scmp.lt.s32.totalorder %s16, 2
      // Predicated region
      $region37: #{tpu_custom_call.1} parent=5 // pred_check
        %p228 = pneg %p227
      $region38: #{tpu_custom_call.1} parent=5 // pred_check_branch
        %230 = sbr.rel (%p228) target = $region40
      $region39: #{tpu_custom_call.1} parent=5 // pred_region
        // Predicated region
        $region41: #{tpu_custom_call.1} parent=39 // pred_check
          %p231 = pneg %p36
        $region42: #{tpu_custom_call.1} parent=39 // pred_check_branch
          %233 = sbr.rel (%p231) target = $region44
        $region43: #{tpu_custom_call.1} parent=39 // pred_region
          %s234 = smul.u32 16, %s16
          %p235 = scmp.lt.s32.totalorder %s234, 31
          %s236 = scalar_select %p235, %s234, 31
          %s237 = smul.addr %s236, 8
          %s238 = scalar_lea.vmem %s0, %s237
          %s239 = smul.u32 16, %s16
        $region44: #{tpu_custom_call.1} parent=39 // pred_fallthru
          _
      $region40: #{tpu_custom_call.1} parent=5 // pred_fallthru
        _
      %p240 = scmp.le.s32.totalorder 1, %s16
      %p241 = scmp.lt.s32.totalorder %s16, 3
      %p242 = pnand %p240, %p241
      %p243 = pneg %p242
      // Predicated region
      $region45: #{tpu_custom_call.1} parent=5 // pred_check
        _
      $region46: #{tpu_custom_call.1} parent=5 // pred_check_branch
        %245 = sbr.rel (%p242) target = $region48
      $region47: #{tpu_custom_call.1} parent=5 // pred_region
        %s246 = ssub.s32 %s16, 1
        %s247 = smul.u32 16, %s21
        %p248 = scmp.lt.s32.totalorder %s247, 31
        %s249 = scalar_select %p248, %s247, 31
        %s250 = smul.addr %s249, 8
        %s251 = scalar_lea.vmem %s0, %s250
        %p252 = pneg %p42
        %p253 = pneg %p39
        %p254 = pneg %p63
        %p255 = pneg %p60
        %p256 = pneg %p84
        %p257 = pneg %p81
        %p258 = pneg %p105
        %p259 = pneg %p102
        %p260 = pneg %p126
        %p261 = pneg %p123
        %p262 = pneg %p147
        %p263 = pneg %p144
        %p264 = pneg %p168
        %p265 = pneg %p165
        %p266 = pneg %p194
        %p267 = pneg %p191
        %s268 = sand.u32 %s181, 1
        %s269 = scalar_lea.sflag [#allocation3], %s268
        %s270 = sand.u32 %s181, 1
        %s271 = smul.addr %s270, 128
        %s272 = scalar_lea.vmem [#allocation2], %s271
        %s273 = smul.u32 16, %s21
        %p274 = scmp.lt.s32.totalorder %s273, 31
        %s275 = scalar_select %p274, %s273, 31
        %s276 = smul.addr %s275, 8
        %s277 = scalar_lea.vmem %s0, %s276
        %s278 = smul.u32 16, %s21
        %s279 = smul.u32 16, %s21
        %v280 = vld [vmem:[%s277] sm:$0xff]
        %v281 = vld [vmem:[%s277 + $0x8] sm:$0xff]
        %v282 = vld [vmem:[%s277 + $0x10] sm:$0xff]
        %v283 = vld [vmem:[%s277 + $0x18] sm:$0xff]
        %v284 = vld [vmem:[%s277 + $0x20] sm:$0xff]
        %v285 = vld [vmem:[%s277 + $0x28] sm:$0xff]
        %v286 = vld [vmem:[%s277 + $0x30] sm:$0xff]
        %v287 = vld [vmem:[%s277 + $0x38] sm:$0xff]
        %v288 = vld [vmem:[%s277 + $0x40] sm:$0xff]
        %v289 = vld [vmem:[%s277 + $0x48] sm:$0xff]
        %v290 = vld [vmem:[%s277 + $0x50] sm:$0xff]
        %v291 = vld [vmem:[%s277 + $0x58] sm:$0xff]
        %v292 = vld [vmem:[%s277 + $0x60] sm:$0xff]
        %v293 = vld [vmem:[%s277 + $0x68] sm:$0xff]
        %v294 = vld [vmem:[%s277 + $0x70] sm:$0xff]
        %v295 = vld [vmem:[%s277 + $0x78] sm:$0xff]
        %v296 = vld [vmem:[%s1] sm:$0xff]
        %v297 = vld [vmem:[%s2] sm:$0x1]
        %v299 = vlaneseq
        %v300 = vshrl.u32 %v299, 7
        %v301 = vsub.s32 0, %v300
        %v302 = vrot.slane %v297, %v301
        %vm304 = vcmask 64512
        %v306 = vsel %vm304, %v280, 0
        %v309 = vsel %vm304, %v281, 0
        %v312 = vsel %vm304, %v282, 0
        %v315 = vsel %vm304, %v283, 0
        %v318 = vsel %vm304, %v284, 0
        %v321 = vsel %vm304, %v285, 0
        %v324 = vsel %vm304, %v286, 0
        %v327 = vsel %vm304, %v287, 0
        %v330 = vsel %vm304, %v288, 0
        %v333 = vsel %vm304, %v289, 0
        %v336 = vsel %vm304, %v290, 0
        %v339 = vsel %vm304, %v291, 0
        %v342 = vsel %vm304, %v292, 0
        %v345 = vsel %vm304, %v293, 0
        %v348 = vsel %vm304, %v294, 0
        %v351 = vsel %vm304, %v295, 0
        %353 = vmatprep.subr.mxu0 0.0
        %354 = vmatpush1.msra.mxu0 %v296
        %355 = vmatprep.subr.mxu0 0.0
        %356 = vmatpush1.msra.mxu0 0.0
        %357 = vmatprep.subr.mxu0 0.0
        %358 = vmatpush1.msra.mxu0 0.0
        %359 = vmatprep.subr.mxu0 0.0
        %360 = vmatpush1.msra.mxu0 0.0
        %361 = vmatprep.subr.mxu0 0.0
        %362 = vmatpush1.msra.mxu0 0.0
        %363 = vmatprep.subr.mxu0 0.0
        %364 = vmatpush1.msra.mxu0 0.0
        %365 = vmatprep.subr.mxu0 0.0
        %366 = vmatpush1.msra.mxu0 0.0
        %367 = vmatprep.subr.mxu0 0.0
        %368 = vmatpush1.msra.mxu0 0.0
        %369 = vmatprep.subr.mxu0 0.0
        %370 = vmatpush1.msra.mxu0 0.0
        %371 = vmatprep.subr.mxu0 0.0
        %372 = vmatpush1.msra.mxu0 0.0
        %373 = vmatprep.subr.mxu0 0.0
        %374 = vmatpush1.msra.mxu0 0.0
        %375 = vmatprep.subr.mxu0 0.0
        %376 = vmatpush1.msra.mxu0 0.0
        %377 = vmatprep.subr.mxu0 0.0
        %378 = vmatpush1.msra.mxu0 0.0
        %379 = vmatprep.subr.mxu0 0.0
        %380 = vmatpush1.msra.mxu0 0.0
        %381 = vmatprep.subr.mxu0 0.0
        %382 = vmatpush1.msra.mxu0 0.0
        %383 = vmatprep.subr.mxu0 0.0
        %384 = vmatpush1.msra.mxu0 0.0
        %385 = vmatprep.subr.mxu0 0.0
        %386 = vmatpush1.msra.mxu0 0.0
        %387 = vmatprep.subr.mxu0 0.0
        %388 = vmatpush1.msra.mxu0 0.0
        %389 = vmatprep.subr.mxu0 0.0
        %390 = vmatpush1.msra.mxu0 0.0
        %391 = vmatprep.subr.mxu0 0.0
        %392 = vmatpush1.msra.mxu0 0.0
        %393 = vmatprep.subr.mxu0 0.0
        %394 = vmatpush1.msra.mxu0 0.0
        %395 = vmatprep.subr.mxu0 0.0
        %396 = vmatpush1.msra.mxu0 0.0
        %397 = vmatprep.subr.mxu0 0.0
        %398 = vmatpush1.msra.mxu0 0.0
        %399 = vmatprep.subr.mxu0 0.0
        %400 = vmatpush1.msra.mxu0 0.0
        %401 = vmatprep.subr.mxu0 0.0
        %402 = vmatpush1.msra.mxu0 0.0
        %403 = vmatprep.subr.mxu0 0.0
        %404 = vmatpush1.msra.mxu0 0.0
        %405 = vmatprep.subr.mxu0 0.0
        %406 = vmatpush1.msra.mxu0 0.0
        %407 = vmatprep.subr.mxu0 0.0
        %408 = vmatpush1.msra.mxu0 0.0
        %409 = vmatprep.subr.mxu0 0.0
        %410 = vmatpush1.msra.mxu0 0.0
        %411 = vmatprep.subr.mxu0 0.0
        %412 = vmatpush1.msra.mxu0 0.0
        %413 = vmatprep.subr.mxu0 0.0
        %414 = vmatpush1.msra.mxu0 0.0
        %415 = vmatprep.subr.mxu0 0.0
        %416 = vmatpush1.msra.mxu0 0.0
        %417 = vmatprep.mubr.f32.mxu0 0.0
        %418 = vmatmul.mubr.f32.gmra.mrb[0].mxu0 %v306
        %v419 = vpop.f32.mrb[0].mxu0
        %v420 = vadd.f32 %v302, %v419
        %v421 = vpop.f32.mrb[0].mxu0
        %422 = vmatprep.mubr.f32.mxu0 0.0
        %423 = vmatmul.mubr.f32.gmra.mrb[0].mxu0 %v309
        %v424 = vpop.f32.mrb[0].mxu0
        %v425 = vadd.f32 %v302, %v424
        %v426 = vpop.f32.mrb[0].mxu0
        %427 = vmatprep.mubr.f32.mxu0 0.0
        %428 = vmatmul.mubr.f32.gmra.mrb[0].mxu0 %v312
        %v429 = vpop.f32.mrb[0].mxu0
        %v430 = vadd.f32 %v302, %v429
        %v431 = vpop.f32.mrb[0].mxu0
        %432 = vmatprep.mubr.f32.mxu0 0.0
        %433 = vmatmul.mubr.f32.gmra.mrb[0].mxu0 %v315
        %v434 = vpop.f32.mrb[0].mxu0
        %v435 = vadd.f32 %v302, %v434
        %v436 = vpop.f32.mrb[0].mxu0
        %437 = vmatprep.mubr.f32.mxu0 0.0
        %438 = vmatmul.mubr.f32.gmra.mrb[0].mxu0 %v318
        %v439 = vpop.f32.mrb[0].mxu0
        %v440 = vadd.f32 %v302, %v439
        %v441 = vpop.f32.mrb[0].mxu0
        %442 = vmatprep.mubr.f32.mxu0 0.0
        %443 = vmatmul.mubr.f32.gmra.mrb[0].mxu0 %v321
        %v444 = vpop.f32.mrb[0].mxu0
        %v445 = vadd.f32 %v302, %v444
        %v446 = vpop.f32.mrb[0].mxu0
        %447 = vmatprep.mubr.f32.mxu0 0.0
        %448 = vmatmul.mubr.f32.gmra.mrb[0].mxu0 %v324
        %v449 = vpop.f32.mrb[0].mxu0
        %v450 = vadd.f32 %v302, %v449
        %v451 = vpop.f32.mrb[0].mxu0
        %452 = vmatprep.mubr.f32.mxu0 0.0
        %453 = vmatmul.mubr.f32.gmra.mrb[0].mxu0 %v327
        %v454 = vpop.f32.mrb[0].mxu0
        %v455 = vadd.f32 %v302, %v454
        %v456 = vpop.f32.mrb[0].mxu0
        %457 = vmatprep.mubr.f32.mxu0 0.0
        %458 = vmatmul.mubr.f32.gmra.mrb[0].mxu0 %v330
        %v459 = vpop.f32.mrb[0].mxu0
        %v460 = vadd.f32 %v302, %v459
        %v461 = vpop.f32.mrb[0].mxu0
        %462 = vmatprep.mubr.f32.mxu0 0.0
        %463 = vmatmul.mubr.f32.gmra.mrb[0].mxu0 %v333
        %v464 = vpop.f32.mrb[0].mxu0
        %v465 = vadd.f32 %v302, %v464
        %v466 = vpop.f32.mrb[0].mxu0
        %467 = vmatprep.mubr.f32.mxu0 0.0
        %468 = vmatmul.mubr.f32.gmra.mrb[0].mxu0 %v336
        %v469 = vpop.f32.mrb[0].mxu0
        %v470 = vadd.f32 %v302, %v469
        %v471 = vpop.f32.mrb[0].mxu0
        %472 = vmatprep.mubr.f32.mxu0 0.0
        %473 = vmatmul.mubr.f32.gmra.mrb[0].mxu0 %v339
        %v474 = vpop.f32.mrb[0].mxu0
        %v475 = vadd.f32 %v302, %v474
        %v476 = vpop.f32.mrb[0].mxu0
        %477 = vmatprep.mubr.f32.mxu0 0.0
        %478 = vmatmul.mubr.f32.gmra.mrb[0].mxu0 %v342
        %v479 = vpop.f32.mrb[0].mxu0
        %v480 = vadd.f32 %v302, %v479
        %v481 = vpop.f32.mrb[0].mxu0
        %482 = vmatprep.mubr.f32.mxu0 0.0
        %483 = vmatmul.mubr.f32.gmra.mrb[0].mxu0 %v345
        %v484 = vpop.f32.mrb[0].mxu0
        %v485 = vadd.f32 %v302, %v484
        %v486 = vpop.f32.mrb[0].mxu0
        %487 = vmatprep.mubr.f32.mxu0 0.0
        %488 = vmatmul.mubr.f32.gmra.mrb[0].mxu0 %v348
        %v489 = vpop.f32.mrb[0].mxu0
        %v490 = vadd.f32 %v302, %v489
        %v491 = vpop.f32.mrb[0].mxu0
        %492 = vmatprep.mubr.f32.mxu0 0.0
        %493 = vmatmul.mubr.f32.gmra.mrb[0].mxu0 %v351
        %v494 = vpop.f32.mrb[0].mxu0
        %v495 = vadd.f32 %v302, %v494
        %v496 = vpop.f32.mrb[0].mxu0
        %497 = vdwg.mxu0
        %v498 = vtanh.pop %v420
        %v499 = vtanh.pop %v425
        %v500 = vtanh.pop %v430
        %v501 = vtanh.pop %v435
        %v502 = vtanh.pop %v440
        %v503 = vtanh.pop %v445
        %v504 = vtanh.pop %v450
        %v505 = vtanh.pop %v455
        %v506 = vtanh.pop %v460
        %v507 = vtanh.pop %v465
        %v508 = vtanh.pop %v470
        %v509 = vtanh.pop %v475
        %v510 = vtanh.pop %v480
        %v511 = vtanh.pop %v485
        %v512 = vtanh.pop %v490
        %v513 = vtanh.pop %v495
        %v514 = vld [vmem:[%s3] sm:$0xff]
        %v515 = vld [vmem:[%s3 + $0x8] sm:$0xff]
        %v516 = vld [vmem:[%s3 + $0x10] sm:$0xff]
        %v517 = vld [vmem:[%s3 + $0x18] sm:$0xff]
        %v518 = vld [vmem:[%s3 + $0x20] sm:$0xff]
        %v519 = vld [vmem:[%s3 + $0x28] sm:$0xff]
        %v520 = vld [vmem:[%s3 + $0x30] sm:$0xff]
        %v521 = vld [vmem:[%s3 + $0x38] sm:$0xff]
        %v522 = vld [vmem:[%s3 + $0x40] sm:$0xff]
        %v523 = vld [vmem:[%s3 + $0x48] sm:$0xff]
        %v524 = vld [vmem:[%s3 + $0x50] sm:$0xff]
        %v525 = vld [vmem:[%s3 + $0x58] sm:$0xff]
        %v526 = vld [vmem:[%s3 + $0x60] sm:$0xff]
        %v527 = vld [vmem:[%s3 + $0x68] sm:$0xff]
        %v528 = vld [vmem:[%s3 + $0x70] sm:$0xff]
        %v529 = vld [vmem:[%s3 + $0x78] sm:$0xff]
        %v530 = vld [vmem:[%s4] sm:$0x1]
        %v532 = vlaneseq
        %v533 = vshrl.u32 %v532, 7
        %v534 = vsub.s32 0, %v533
        %v535 = vrot.slane %v530, %v534
        %537 = vmatprep.subr.mxu0 0.0
        %538 = vmatpush1.msra.mxu0 %v514
        %539 = vmatprep.subr.mxu0 0.0
        %540 = vmatpush1.msra.mxu0 %v515
        %541 = vmatprep.subr.mxu0 0.0
        %542 = vmatpush1.msra.mxu0 %v516
        %543 = vmatprep.subr.mxu0 0.0
        %544 = vmatpush1.msra.mxu0 %v517
        %545 = vmatprep.subr.mxu0 0.0
        %546 = vmatpush1.msra.mxu0 %v518
        %547 = vmatprep.subr.mxu0 0.0
        %548 = vmatpush1.msra.mxu0 %v519
        %549 = vmatprep.subr.mxu0 0.0
        %550 = vmatpush1.msra.mxu0 %v520
        %551 = vmatprep.subr.mxu0 0.0
        %552 = vmatpush1.msra.mxu0 %v521
        %553 = vmatprep.subr.mxu0 0.0
        %554 = vmatpush1.msra.mxu0 %v522
        %555 = vmatprep.subr.mxu0 0.0
        %556 = vmatpush1.msra.mxu0 %v523
        %557 = vmatprep.subr.mxu0 0.0
        %558 = vmatpush1.msra.mxu0 %v524
        %559 = vmatprep.subr.mxu0 0.0
        %560 = vmatpush1.msra.mxu0 %v525
        %561 = vmatprep.subr.mxu0 0.0
        %562 = vmatpush1.msra.mxu0 %v526
        %563 = vmatprep.subr.mxu0 0.0
        %564 = vmatpush1.msra.mxu0 %v527
        %565 = vmatprep.subr.mxu0 0.0
        %566 = vmatpush1.msra.mxu0 %v528
        %567 = vmatprep.subr.mxu0 0.0
        %568 = vmatpush1.msra.mxu0 %v529
        %569 = vmatprep.subr.mxu0 0.0
        %570 = vmatpush1.msra.mxu0 0.0
        %571 = vmatprep.subr.mxu0 0.0
        %572 = vmatpush1.msra.mxu0 0.0
        %573 = vmatprep.subr.mxu0 0.0
        %574 = vmatpush1.msra.mxu0 0.0
        %575 = vmatprep.subr.mxu0 0.0
        %576 = vmatpush1.msra.mxu0 0.0
        %577 = vmatprep.subr.mxu0 0.0
        %578 = vmatpush1.msra.mxu0 0.0
        %579 = vmatprep.subr.mxu0 0.0
        %580 = vmatpush1.msra.mxu0 0.0
        %581 = vmatprep.subr.mxu0 0.0
        %582 = vmatpush1.msra.mxu0 0.0
        %583 = vmatprep.subr.mxu0 0.0
        %584 = vmatpush1.msra.mxu0 0.0
        %585 = vmatprep.subr.mxu0 0.0
        %586 = vmatpush1.msra.mxu0 0.0
        %587 = vmatprep.subr.mxu0 0.0
        %588 = vmatpush1.msra.mxu0 0.0
        %589 = vmatprep.subr.mxu0 0.0
        %590 = vmatpush1.msra.mxu0 0.0
        %591 = vmatprep.subr.mxu0 0.0
        %592 = vmatpush1.msra.mxu0 0.0
        %593 = vmatprep.subr.mxu0 0.0
        %594 = vmatpush1.msra.mxu0 0.0
        %595 = vmatprep.subr.mxu0 0.0
        %596 = vmatpush1.msra.mxu0 0.0
        %597 = vmatprep.subr.mxu0 0.0
        %598 = vmatpush1.msra.mxu0 0.0
        %599 = vmatprep.subr.mxu0 0.0
        %600 = vmatpush1.msra.mxu0 0.0
        %601 = vmatprep.mubr.f32.mxu0 0.0
        %602 = vmatmul.mubr.f32.gmra.mrb[0].mxu0 %v498
        %v603 = vpop.f32.mrb[0].mxu0
        %v604 = vadd.f32 %v535, %v603
        %v605 = vpop.f32.mrb[0].mxu0
        %606 = vmatprep.mubr.f32.mxu0 0.0
        %607 = vmatmul.mubr.f32.gmra.mrb[0].mxu0 %v499
        %v608 = vpop.f32.mrb[0].mxu0
        %v609 = vadd.f32 %v535, %v608
        %v610 = vpop.f32.mrb[0].mxu0
        %611 = vmatprep.mubr.f32.mxu0 0.0
        %612 = vmatmul.mubr.f32.gmra.mrb[0].mxu0 %v500
        %v613 = vpop.f32.mrb[0].mxu0
        %v614 = vadd.f32 %v535, %v613
        %v615 = vpop.f32.mrb[0].mxu0
        %616 = vmatprep.mubr.f32.mxu0 0.0
        %617 = vmatmul.mubr.f32.gmra.mrb[0].mxu0 %v501
        %v618 = vpop.f32.mrb[0].mxu0
        %v619 = vadd.f32 %v535, %v618
        %v620 = vpop.f32.mrb[0].mxu0
        %621 = vmatprep.mubr.f32.mxu0 0.0
        %622 = vmatmul.mubr.f32.gmra.mrb[0].mxu0 %v502
        %v623 = vpop.f32.mrb[0].mxu0
        %v624 = vadd.f32 %v535, %v623
        %v625 = vpop.f32.mrb[0].mxu0
        %626 = vmatprep.mubr.f32.mxu0 0.0
        %627 = vmatmul.mubr.f32.gmra.mrb[0].mxu0 %v503
        %v628 = vpop.f32.mrb[0].mxu0
        %v629 = vadd.f32 %v535, %v628
        %v630 = vpop.f32.mrb[0].mxu0
        %631 = vmatprep.mubr.f32.mxu0 0.0
        %632 = vmatmul.mubr.f32.gmra.mrb[0].mxu0 %v504
        %v633 = vpop.f32.mrb[0].mxu0
        %v634 = vadd.f32 %v535, %v633
        %v635 = vpop.f32.mrb[0].mxu0
        %636 = vmatprep.mubr.f32.mxu0 0.0
        %637 = vmatmul.mubr.f32.gmra.mrb[0].mxu0 %v505
        %v638 = vpop.f32.mrb[0].mxu0
        %v639 = vadd.f32 %v535, %v638
        %v640 = vpop.f32.mrb[0].mxu0
        %641 = vmatprep.mubr.f32.mxu0 0.0
        %642 = vmatmul.mubr.f32.gmra.mrb[0].mxu0 %v506
        %v643 = vpop.f32.mrb[0].mxu0
        %v644 = vadd.f32 %v535, %v643
        %v645 = vpop.f32.mrb[0].mxu0
        %646 = vmatprep.mubr.f32.mxu0 0.0
        %647 = vmatmul.mubr.f32.gmra.mrb[0].mxu0 %v507
        %v648 = vpop.f32.mrb[0].mxu0
        %v649 = vadd.f32 %v535, %v648
        %v650 = vpop.f32.mrb[0].mxu0
        %651 = vmatprep.mubr.f32.mxu0 0.0
        %652 = vmatmul.mubr.f32.gmra.mrb[0].mxu0 %v508
        %v653 = vpop.f32.mrb[0].mxu0
        %v654 = vadd.f32 %v535, %v653
        %v655 = vpop.f32.mrb[0].mxu0
        %656 = vmatprep.mubr.f32.mxu0 0.0
        %657 = vmatmul.mubr.f32.gmra.mrb[0].mxu0 %v509
        %v658 = vpop.f32.mrb[0].mxu0
        %v659 = vadd.f32 %v535, %v658
        %v660 = vpop.f32.mrb[0].mxu0
        %661 = vmatprep.mubr.f32.mxu0 0.0
        %662 = vmatmul.mubr.f32.gmra.mrb[0].mxu0 %v510
        %v663 = vpop.f32.mrb[0].mxu0
        %v664 = vadd.f32 %v535, %v663
        %v665 = vpop.f32.mrb[0].mxu0
        %666 = vmatprep.mubr.f32.mxu0 0.0
        %667 = vmatmul.mubr.f32.gmra.mrb[0].mxu0 %v511
        %v668 = vpop.f32.mrb[0].mxu0
        %v669 = vadd.f32 %v535, %v668
        %v670 = vpop.f32.mrb[0].mxu0
        %671 = vmatprep.mubr.f32.mxu0 0.0
        %672 = vmatmul.mubr.f32.gmra.mrb[0].mxu0 %v512
        %v673 = vpop.f32.mrb[0].mxu0
        %v674 = vadd.f32 %v535, %v673
        %v675 = vpop.f32.mrb[0].mxu0
        %676 = vmatprep.mubr.f32.mxu0 0.0
        %677 = vmatmul.mubr.f32.gmra.mrb[0].mxu0 %v513
        %v678 = vpop.f32.mrb[0].mxu0
        %v679 = vadd.f32 %v535, %v678
        %v680 = vpop.f32.mrb[0].mxu0
        %681 = vdwg.mxu0
        %v682 = vtanh.pop %v604
        %v683 = vtanh.pop %v609
        %v684 = vtanh.pop %v614
        %v685 = vtanh.pop %v619
        %v686 = vtanh.pop %v624
        %v687 = vtanh.pop %v629
        %v688 = vtanh.pop %v634
        %v689 = vtanh.pop %v639
        %v690 = vtanh.pop %v644
        %v691 = vtanh.pop %v649
        %v692 = vtanh.pop %v654
        %v693 = vtanh.pop %v659
        %v694 = vtanh.pop %v664
        %v695 = vtanh.pop %v669
        %v696 = vtanh.pop %v674
        %v697 = vtanh.pop %v679
        %v698 = vld [vmem:[%s5] sm:$0xff]
        %v699 = vld [vmem:[%s5 + $0x8] sm:$0xff]
        %v700 = vld [vmem:[%s5 + $0x10] sm:$0xff]
        %v701 = vld [vmem:[%s5 + $0x18] sm:$0xff]
        %v702 = vld [vmem:[%s5 + $0x20] sm:$0xff]
        %v703 = vld [vmem:[%s5 + $0x28] sm:$0xff]
        %v704 = vld [vmem:[%s5 + $0x30] sm:$0xff]
        %v705 = vld [vmem:[%s5 + $0x38] sm:$0xff]
        %v706 = vld [vmem:[%s5 + $0x40] sm:$0xff]
        %v707 = vld [vmem:[%s5 + $0x48] sm:$0xff]
        %v708 = vld [vmem:[%s5 + $0x50] sm:$0xff]
        %v709 = vld [vmem:[%s5 + $0x58] sm:$0xff]
        %v710 = vld [vmem:[%s5 + $0x60] sm:$0xff]
        %v711 = vld [vmem:[%s5 + $0x68] sm:$0xff]
        %v712 = vld [vmem:[%s5 + $0x70] sm:$0xff]
        %v713 = vld [vmem:[%s5 + $0x78] sm:$0xff]
        %v714 = vld [vmem:[%s6] sm:$0x1]
        %v716 = vlaneseq
        %v717 = vshrl.u32 %v716, 7
        %v718 = vsub.s32 0, %v717
        %v719 = vrot.slane %v714, %v718
        %721 = vmatprep.subr.mxu0 0.0
        %722 = vmatpush1.msra.mxu0 %v698
        %723 = vmatprep.subr.mxu0 0.0
        %724 = vmatpush1.msra.mxu0 %v699
        %725 = vmatprep.subr.mxu0 0.0
        %726 = vmatpush1.msra.mxu0 %v700
        %727 = vmatprep.subr.mxu0 0.0
        %728 = vmatpush1.msra.mxu0 %v701
        %729 = vmatprep.subr.mxu0 0.0
        %730 = vmatpush1.msra.mxu0 %v702
        %731 = vmatprep.subr.mxu0 0.0
        %732 = vmatpush1.msra.mxu0 %v703
        %733 = vmatprep.subr.mxu0 0.0
        %734 = vmatpush1.msra.mxu0 %v704
        %735 = vmatprep.subr.mxu0 0.0
        %736 = vmatpush1.msra.mxu0 %v705
        %737 = vmatprep.subr.mxu0 0.0
        %738 = vmatpush1.msra.mxu0 %v706
        %739 = vmatprep.subr.mxu0 0.0
        %740 = vmatpush1.msra.mxu0 %v707
        %741 = vmatprep.subr.mxu0 0.0
        %742 = vmatpush1.msra.mxu0 %v708
        %743 = vmatprep.subr.mxu0 0.0
        %744 = vmatpush1.msra.mxu0 %v709
        %745 = vmatprep.subr.mxu0 0.0
        %746 = vmatpush1.msra.mxu0 %v710
        %747 = vmatprep.subr.mxu0 0.0
        %748 = vmatpush1.msra.mxu0 %v711
        %749 = vmatprep.subr.mxu0 0.0
        %750 = vmatpush1.msra.mxu0 %v712
        %751 = vmatprep.subr.mxu0 0.0
        %752 = vmatpush1.msra.mxu0 %v713
        %753 = vmatprep.subr.mxu0 0.0
        %754 = vmatpush1.msra.mxu0 0.0
        %755 = vmatprep.subr.mxu0 0.0
        %756 = vmatpush1.msra.mxu0 0.0
        %757 = vmatprep.subr.mxu0 0.0
        %758 = vmatpush1.msra.mxu0 0.0
        %759 = vmatprep.subr.mxu0 0.0
        %760 = vmatpush1.msra.mxu0 0.0
        %761 = vmatprep.subr.mxu0 0.0
        %762 = vmatpush1.msra.mxu0 0.0
        %763 = vmatprep.subr.mxu0 0.0
        %764 = vmatpush1.msra.mxu0 0.0
        %765 = vmatprep.subr.mxu0 0.0
        %766 = vmatpush1.msra.mxu0 0.0
        %767 = vmatprep.subr.mxu0 0.0
        %768 = vmatpush1.msra.mxu0 0.0
        %769 = vmatprep.subr.mxu0 0.0
        %770 = vmatpush1.msra.mxu0 0.0
        %771 = vmatprep.subr.mxu0 0.0
        %772 = vmatpush1.msra.mxu0 0.0
        %773 = vmatprep.subr.mxu0 0.0
        %774 = vmatpush1.msra.mxu0 0.0
        %775 = vmatprep.subr.mxu0 0.0
        %776 = vmatpush1.msra.mxu0 0.0
        %777 = vmatprep.subr.mxu0 0.0
        %778 = vmatpush1.msra.mxu0 0.0
        %779 = vmatprep.subr.mxu0 0.0
        %780 = vmatpush1.msra.mxu0 0.0
        %781 = vmatprep.subr.mxu0 0.0
        %782 = vmatpush1.msra.mxu0 0.0
        %783 = vmatprep.subr.mxu0 0.0
        %784 = vmatpush1.msra.mxu0 0.0
        %785 = vmatprep.mubr.f32.mxu0 0.0
        %786 = vmatmul.mubr.f32.gmra.mrb[0].mxu0 %v682
        %v787 = vpop.f32.mrb[0].mxu0
        %v788 = vadd.f32 %v719, %v787
        %v789 = vpop.f32.mrb[0].mxu0
        %790 = vmatprep.mubr.f32.mxu0 0.0
        %791 = vmatmul.mubr.f32.gmra.mrb[0].mxu0 %v683
        %v792 = vpop.f32.mrb[0].mxu0
        %v793 = vadd.f32 %v719, %v792
        %v794 = vpop.f32.mrb[0].mxu0
        %795 = vmatprep.mubr.f32.mxu0 0.0
        %796 = vmatmul.mubr.f32.gmra.mrb[0].mxu0 %v684
        %v797 = vpop.f32.mrb[0].mxu0
        %v798 = vadd.f32 %v719, %v797
        %v799 = vpop.f32.mrb[0].mxu0
        %800 = vmatprep.mubr.f32.mxu0 0.0
        %801 = vmatmul.mubr.f32.gmra.mrb[0].mxu0 %v685
        %v802 = vpop.f32.mrb[0].mxu0
        %v803 = vadd.f32 %v719, %v802
        %v804 = vpop.f32.mrb[0].mxu0
        %805 = vmatprep.mubr.f32.mxu0 0.0
        %806 = vmatmul.mubr.f32.gmra.mrb[0].mxu0 %v686
        %v807 = vpop.f32.mrb[0].mxu0
        %v808 = vadd.f32 %v719, %v807
        %v809 = vpop.f32.mrb[0].mxu0
        %810 = vmatprep.mubr.f32.mxu0 0.0
        %811 = vmatmul.mubr.f32.gmra.mrb[0].mxu0 %v687
        %v812 = vpop.f32.mrb[0].mxu0
        %v813 = vadd.f32 %v719, %v812
        %v814 = vpop.f32.mrb[0].mxu0
        %815 = vmatprep.mubr.f32.mxu0 0.0
        %816 = vmatmul.mubr.f32.gmra.mrb[0].mxu0 %v688
        %v817 = vpop.f32.mrb[0].mxu0
        %v818 = vadd.f32 %v719, %v817
        %v819 = vpop.f32.mrb[0].mxu0
        %820 = vmatprep.mubr.f32.mxu0 0.0
        %821 = vmatmul.mubr.f32.gmra.mrb[0].mxu0 %v689
        %v822 = vpop.f32.mrb[0].mxu0
        %v823 = vadd.f32 %v719, %v822
        %v824 = vpop.f32.mrb[0].mxu0
        %825 = vmatprep.mubr.f32.mxu0 0.0
        %826 = vmatmul.mubr.f32.gmra.mrb[0].mxu0 %v690
        %v827 = vpop.f32.mrb[0].mxu0
        %v828 = vadd.f32 %v719, %v827
        %v829 = vpop.f32.mrb[0].mxu0
        %830 = vmatprep.mubr.f32.mxu0 0.0
        %831 = vmatmul.mubr.f32.gmra.mrb[0].mxu0 %v691
        %v832 = vpop.f32.mrb[0].mxu0
        %v833 = vadd.f32 %v719, %v832
        %v834 = vpop.f32.mrb[0].mxu0
        %835 = vmatprep.mubr.f32.mxu0 0.0
        %836 = vmatmul.mubr.f32.gmra.mrb[0].mxu0 %v692
        %v837 = vpop.f32.mrb[0].mxu0
        %v838 = vadd.f32 %v719, %v837
        %v839 = vpop.f32.mrb[0].mxu0
        %840 = vmatprep.mubr.f32.mxu0 0.0
        %841 = vmatmul.mubr.f32.gmra.mrb[0].mxu0 %v693
        %v842 = vpop.f32.mrb[0].mxu0
        %v843 = vadd.f32 %v719, %v842
        %v844 = vpop.f32.mrb[0].mxu0
        %845 = vmatprep.mubr.f32.mxu0 0.0
        %846 = vmatmul.mubr.f32.gmra.mrb[0].mxu0 %v694
        %v847 = vpop.f32.mrb[0].mxu0
        %v848 = vadd.f32 %v719, %v847
        %v849 = vpop.f32.mrb[0].mxu0
        %850 = vmatprep.mubr.f32.mxu0 0.0
        %851 = vmatmul.mubr.f32.gmra.mrb[0].mxu0 %v695
        %v852 = vpop.f32.mrb[0].mxu0
        %v853 = vadd.f32 %v719, %v852
        %v854 = vpop.f32.mrb[0].mxu0
        %855 = vmatprep.mubr.f32.mxu0 0.0
        %856 = vmatmul.mubr.f32.gmra.mrb[0].mxu0 %v696
        %v857 = vpop.f32.mrb[0].mxu0
        %v858 = vadd.f32 %v719, %v857
        %v859 = vpop.f32.mrb[0].mxu0
        %860 = vmatprep.mubr.f32.mxu0 0.0
        %861 = vmatmul.mubr.f32.gmra.mrb[0].mxu0 %v697
        %v862 = vpop.f32.mrb[0].mxu0
        %v863 = vadd.f32 %v719, %v862
        %v864 = vpop.f32.mrb[0].mxu0
        %865 = vdwg.mxu0
        %v866 = vtanh.pop %v788
        %v867 = vtanh.pop %v793
        %v868 = vtanh.pop %v798
        %v869 = vtanh.pop %v803
        %v870 = vtanh.pop %v808
        %v871 = vtanh.pop %v813
        %v872 = vtanh.pop %v818
        %v873 = vtanh.pop %v823
        %v874 = vtanh.pop %v828
        %v875 = vtanh.pop %v833
        %v876 = vtanh.pop %v838
        %v877 = vtanh.pop %v843
        %v878 = vtanh.pop %v848
        %v879 = vtanh.pop %v853
        %v880 = vtanh.pop %v858
        %v881 = vtanh.pop %v863
        %v882 = vmul.f32 %v866, 1.5707964
        %v883 = vmul.f32 %v867, 1.5707964
        %v884 = vmul.f32 %v868, 1.5707964
        %v885 = vmul.f32 %v869, 1.5707964
        %v886 = vmul.f32 %v870, 1.5707964
        %v887 = vmul.f32 %v871, 1.5707964
        %v888 = vmul.f32 %v872, 1.5707964
        %v889 = vmul.f32 %v873, 1.5707964
        %v890 = vmul.f32 %v874, 1.5707964
        %v891 = vmul.f32 %v875, 1.5707964
        %v892 = vmul.f32 %v876, 1.5707964
        %v893 = vmul.f32 %v877, 1.5707964
        %v894 = vmul.f32 %v878, 1.5707964
        %v895 = vmul.f32 %v879, 1.5707964
        %v896 = vmul.f32 %v880, 1.5707964
        %v897 = vmul.f32 %v881, 1.5707964
        %898 = vst [vmem:[%s272] sm:$0xff] %v882
        %899 = vst [vmem:[%s272 + $0x8] sm:$0xff] %v883
        %900 = vst [vmem:[%s272 + $0x10] sm:$0xff] %v884
        %901 = vst [vmem:[%s272 + $0x18] sm:$0xff] %v885
        %902 = vst [vmem:[%s272 + $0x20] sm:$0xff] %v886
        %903 = vst [vmem:[%s272 + $0x28] sm:$0xff] %v887
        %904 = vst [vmem:[%s272 + $0x30] sm:$0xff] %v888
        %905 = vst [vmem:[%s272 + $0x38] sm:$0xff] %v889
        %906 = vst [vmem:[%s272 + $0x40] sm:$0xff] %v890
        %907 = vst [vmem:[%s272 + $0x48] sm:$0xff] %v891
        %908 = vst [vmem:[%s272 + $0x50] sm:$0xff] %v892
        %909 = vst [vmem:[%s272 + $0x58] sm:$0xff] %v893
        %910 = vst [vmem:[%s272 + $0x60] sm:$0xff] %v894
        %911 = vst [vmem:[%s272 + $0x68] sm:$0xff] %v895
        %912 = vst [vmem:[%s272 + $0x70] sm:$0xff] %v896
        %913 = vst [vmem:[%s272 + $0x78] sm:$0xff] %v897
        %s914 = sand.u32 %s181, 1
        %s915 = scalar_lea.sflag [#allocation3], %s914
        %s916 = sand.u32 %s181, 1
        %s917 = smul.addr %s916, 128
        %s918 = scalar_lea.vmem [#allocation2], %s917
        // Predicated region
        $region49: #{tpu_custom_call.1} parent=47 // pred_check
          %p919 = pneg %p191
        $region50: #{tpu_custom_call.1} parent=47 // pred_check_branch
          %921 = sbr.rel (%p919) target = $region52
        $region51: #{tpu_custom_call.1} parent=47 // pred_region
          %s922 = smul.u32 16, %s21
          %s924 = ssub.s32 2048, 2048
          %925 = vsyncadd %s915, %s924
          %s926 = smul.addr %s922, 128
          %s927 = scalar_lea.hbm %s7, %s926
          %s928 = sshll.u32 %s918, 4
          %s929 = int_to_ptr.vmem [resolvable:$true] %s928
          %934 = dma.vmem_to_hbm [thread:$0]  %s929, 2048, %s927, %s915, 128, 128, 8
        $region52: #{tpu_custom_call.1} parent=47 // pred_fallthru
          _
      $region48: #{tpu_custom_call.1} parent=5 // pred_fallthru
        _
      %p935 = scmp.le.s32.totalorder 2, %s16
      // Predicated region
      $region53: #{tpu_custom_call.1} parent=5 // pred_check
        %p936 = pneg %p935
      $region54: #{tpu_custom_call.1} parent=5 // pred_check_branch
        %938 = sbr.rel (%p936) target = $region56
      $region55: #{tpu_custom_call.1} parent=5 // pred_region
        %s939 = ssub.s32 %s16, 2
        // Predicated region
        $region57: #{tpu_custom_call.1} parent=55 // pred_check
          %p940 = pneg %p197
        $region58: #{tpu_custom_call.1} parent=55 // pred_check_branch
          %942 = sbr.rel (%p940) target = $region60
        $region59: #{tpu_custom_call.1} parent=55 // pred_region
          %s943 = sand.u32 %s182, 1
          %s944 = scalar_lea.sflag [#allocation3], %s943
          %s945 = sand.u32 %s182, 1
          %s946 = smul.addr %s945, 128
          %s947 = scalar_lea.vmem [#allocation2], %s946
          %948 = dma.done %s944, 2048
        $region60: #{tpu_custom_call.1} parent=55 // pred_fallthru
          _
      $region56: #{tpu_custom_call.1} parent=5 // pred_fallthru
        _
    $region6: #{tpu_custom_call.1} parent=1 // loop_footer
      %s20 = sadd.s32 1, %s16
    $region7: #{tpu_custom_call.1} parent=1 // loop_footer_branch
      %15 = sbr.rel target = $region3
    $region8: #{tpu_custom_call.1} parent=1 // loop_exit
      _
    %949 = vsyncpa [#allocation3], 1
    %s950 = scalar_lea.sflag [#allocation3], 1
    %951 = vsyncpa %s950, 1

</llo_original>
